<compile_context>
chip_gen: v7x
topology: tpu7x:2x2x1
jax: 0.10.0
libtpu: 0.0.40
codegen_flags: <defaults>
</compile_context>

<pallas_src>
import jax
import jax.numpy as jnp
from jax.experimental import pallas as pl
from jax.experimental.pallas import tpu as pltpu

HIDDEN_SIZE = 2
INPUT_SIZE = 5
NUM_CLASSES = 1
NUM_LAYERS = 1  # kernel implements the single-layer case (num_layers=1)
FC1_SIZE = 128


def lstm1_kernel(x_ref, wih_ref, whh_ref, b_ref, w1_ref, b1_ref, w2_ref, b2_ref,
                 out_ref):
    """Whole forward pass in one VMEM-resident kernel.

    x_ref   : (B, T, I)    batch-first input (no wrapper transpose)
    wih_ref : (I, 4H)      concatenated input->hidden weights, gate order i|f|g|o
    whh_ref : (H, 4H)      concatenated hidden->hidden weights
    b_ref   : (1, 4H)      combined gate bias (b_ih + b_hh)
    w1_ref  : (H, 128)     fc_1 weight, transposed
    b1_ref  : (1, 128)
    w2_ref  : (C, 128)     fc weight (PyTorch layout, row-per-class)
    b2_ref  : (1, C)
    out_ref : (B, C)
    """
    B, T, I = x_ref.shape
    H = whh_ref.shape[0]
    C = w2_ref.shape[0]

    x = x_ref[...]        # (B, T, I)
    wih = wih_ref[...]    # (I, 4H)
    whh = whh_ref[...]    # (H, 4H)
    bias = b_ref[...]     # (1, 4H)

    # ---- Hoisted input projection: xproj[b, t, :] = x[b, t, :] @ W_ih + bias.
    # Done as I broadcast FMAs on the VPU; entirely off the serial chain.
    xproj = x[:, :, 0:1] * wih[0:1, :]                 # (B, T, 4H)
    for k in range(1, I):
        xproj = xproj + x[:, :, k:k + 1] * wih[k:k + 1, :]
    xproj = xproj + bias                               # broadcast (1, 4H)

    h = jnp.zeros((B, H), jnp.float32)
    c = jnp.zeros((B, H), jnp.float32)

    # ---- Recurrence, fully unrolled (T is static). Per step: 2 VPU FMAs for
    # the hidden matmul, 1 packed sigmoid + 1 packed tanh + tanh(c) on the EUP.
    for t in range(T):
        gates = xproj[:, t, :]                         # (B, 4H), static slice
        for j in range(H):
            gates = gates + h[:, j:j + 1] * whh[j:j + 1, :]
        sig = jax.nn.sigmoid(gates)                    # one EUP push: i, f, o
        tnh = jnp.tanh(gates)                          # one EUP push: g
        i_g = sig[:, 0:H]
        f_g = sig[:, H:2 * H]
        g_g = tnh[:, 2 * H:3 * H]
        o_g = sig[:, 3 * H:4 * H]
        c = f_g * c + i_g * g_g
        h = o_g * jnp.tanh(c)

    # ---- Head: relu -> fc_1 (VPU FMAs, H=2) -> relu -> fc (lane reduction).
    hr = jnp.maximum(h, 0.0)                           # (B, H)
    acc = hr[:, 0:1] * w1_ref[0:1, :]
    for j in range(1, H):
        acc = acc + hr[:, j:j + 1] * w1_ref[j:j + 1, :]
    a1 = jnp.maximum(acc + b1_ref[...], 0.0)           # (B, 128) lane-dense

    outs = []
    for cidx in range(C):                              # C == 1 (num_classes)
        outs.append(jnp.sum(a1 * w2_ref[cidx:cidx + 1, :],
                            axis=-1, keepdims=True))   # (B, 1) XLU reduce
    out = outs[0] if C == 1 else jnp.concatenate(outs, axis=-1)
    out = out + b2_ref[...]                            # (B, C)
    out_ref[...] = out.astype(out_ref.dtype)


@jax.jit
def lstm1_forward(x, params):
    """x: (B, T, I) batch-first, like the PyTorch module."""
    B = x.shape[0]
    x = x.astype(jnp.float32)

    vmem = pl.BlockSpec(memory_space=pltpu.MemorySpace.VMEM)
    operands = (
        x,
        params["wih_cat"], params["whh_cat"], params["b_gates"],
        params["w1_t"], params["b1"],
        params["w2_row"], params["b2"],
    )
    return pl.pallas_call(
        lstm1_kernel,
        out_shape=jax.ShapeDtypeStruct((B, NUM_CLASSES), jnp.float32),
        in_specs=[vmem] * len(operands),
        out_specs=vmem,
    )(*operands)


def init_params(key):
    """Deterministic parameter init mirroring the PyTorch module's shapes."""
    ks = jax.random.split(key, 8)
    H, I, C, F1 = HIDDEN_SIZE, INPUT_SIZE, NUM_CLASSES, FC1_SIZE
    bound = 1.0 / jnp.sqrt(H)

    # nn.LSTM: weight_ih_l0 (4H, I), weight_hh_l0 (4H, H), biases (4H,)
    # Gate blocks along the 4H axis are ordered [i | f | g | o].
    w_ih = jax.random.uniform(ks[0], (4 * H, I), jnp.float32, -bound, bound)
    w_hh = jax.random.uniform(ks[1], (4 * H, H), jnp.float32, -bound, bound)
    b_ih = jax.random.uniform(ks[2], (4 * H,), jnp.float32, -bound, bound)
    b_hh = jax.random.uniform(ks[3], (4 * H,), jnp.float32, -bound, bound)

    wih_cat = w_ih.T                          # (I, 4H)
    whh_cat = w_hh.T                          # (H, 4H)
    b_gates = (b_ih + b_hh)[None, :]          # (1, 4H)

    # fc_1: Linear(H, 128); fc: Linear(128, C)
    b1u = 1.0 / jnp.sqrt(H)
    w1 = jax.random.uniform(ks[4], (F1, H), jnp.float32, -b1u, b1u)
    b1 = jax.random.uniform(ks[5], (F1,), jnp.float32, -b1u, b1u)
    b2u = 1.0 / jnp.sqrt(F1)
    w2 = jax.random.uniform(ks[6], (C, F1), jnp.float32, -b2u, b2u)
    b2 = jax.random.uniform(ks[7], (C,), jnp.float32, -b2u, b2u)

    return {
        "wih_cat": wih_cat, "whh_cat": whh_cat, "b_gates": b_gates,
        "w1_t": w1.T, "b1": b1[None, :],
        "w2_row": w2, "b2": b2[None, :],
    }


def reference_forward(x, params):
    """Pure-JAX reference of the same math (for correctness check)."""
    B, T, _ = x.shape
    H = HIDDEN_SIZE
    h = jnp.zeros((B, H), jnp.float32)
    c = jnp.zeros((B, H), jnp.float32)
    for t in range(T):
        g = (x[:, t, :] @ params["wih_cat"] + h @ params["whh_cat"]
             + params["b_gates"])
        i_g = jax.nn.sigmoid(g[:, 0:H])
        f_g = jax.nn.sigmoid(g[:, H:2 * H])
        g_g = jnp.tanh(g[:, 2 * H:3 * H])
        o_g = jax.nn.sigmoid(g[:, 3 * H:4 * H])
        c = f_g * c + i_g * g_g
        h = o_g * jnp.tanh(c)
    out = jnp.maximum(h, 0.0)
    out = jnp.maximum(out @ params["w1_t"] + params["b1"], 0.0)
    return out @ params["w2_row"].T + params["b2"]


if __name__ == "__main__":
    key = jax.random.PRNGKey(0)
    k_param, k_x = jax.random.split(key)

    batch, seq_length = 2, 8
    x = jax.random.normal(k_x, (batch, seq_length, INPUT_SIZE), jnp.float32)
    params = init_params(k_param)

    out = jax.block_until_ready(lstm1_forward(x, params))

    ref = reference_forward(x, params)
    assert out.shape == (batch, NUM_CLASSES)
    assert jnp.allclose(out, ref, atol=1e-5, rtol=1e-5)

    print("KERNEL_OK")
</pallas_src>

<mosaic_0001>
module attributes {stable_mosaic.version = 11 : i64} {
  func.func @lstm1_kernel(%arg0: memref<2x8x5xf32, #tpu.memory_space<vmem>>, %arg1: memref<5x8xf32, #tpu.memory_space<vmem>>, %arg2: memref<2x8xf32, #tpu.memory_space<vmem>>, %arg3: memref<1x8xf32, #tpu.memory_space<vmem>>, %arg4: memref<2x128xf32, #tpu.memory_space<vmem>>, %arg5: memref<1x128xf32, #tpu.memory_space<vmem>>, %arg6: memref<1x128xf32, #tpu.memory_space<vmem>>, %arg7: memref<1x1xf32, #tpu.memory_space<vmem>>, %arg8: memref<2x1xf32, #tpu.memory_space<vmem>>) attributes {dimension_semantics = [], scalar_prefetch = 0 : i64, scratch_operands = 0 : i64, tpu.core_type = #tpu.core_type<tc>} {
    %c0 = arith.constant 0 : index
    %c0_0 = arith.constant 0 : index
    %c0_1 = arith.constant 0 : index
    %0 = vector.load %arg0[%c0, %c0_0, %c0_1] : memref<2x8x5xf32, #tpu.memory_space<vmem>>, vector<2x8x5xf32>
    %c0_2 = arith.constant 0 : index
    %c0_3 = arith.constant 0 : index
    %1 = vector.load %arg1[%c0_2, %c0_3] : memref<5x8xf32, #tpu.memory_space<vmem>>, vector<5x8xf32>
    %c0_4 = arith.constant 0 : index
    %c0_5 = arith.constant 0 : index
    %2 = vector.load %arg2[%c0_4, %c0_5] : memref<2x8xf32, #tpu.memory_space<vmem>>, vector<2x8xf32>
    %c0_6 = arith.constant 0 : index
    %c0_7 = arith.constant 0 : index
    %3 = vector.load %arg3[%c0_6, %c0_7] : memref<1x8xf32, #tpu.memory_space<vmem>>, vector<1x8xf32>
    %4 = vector.extract_strided_slice %0 {offsets = [0, 0, 0], sizes = [2, 8, 1], strides = [1, 1, 1]} : vector<2x8x5xf32> to vector<2x8x1xf32>
    %5 = vector.extract_strided_slice %1 {offsets = [0, 0], sizes = [1, 8], strides = [1, 1]} : vector<5x8xf32> to vector<1x8xf32>
    %6 = vector.shape_cast %5 : vector<1x8xf32> to vector<1x1x8xf32>
    %7 = vector.broadcast %4 : vector<2x8x1xf32> to vector<2x8x8xf32>
    %8 = vector.broadcast %6 : vector<1x1x8xf32> to vector<2x8x8xf32>
    %9 = arith.mulf %7, %8 : vector<2x8x8xf32>
    %10 = vector.extract_strided_slice %0 {offsets = [0, 0, 1], sizes = [2, 8, 1], strides = [1, 1, 1]} : vector<2x8x5xf32> to vector<2x8x1xf32>
    %11 = vector.extract_strided_slice %1 {offsets = [1, 0], sizes = [1, 8], strides = [1, 1]} : vector<5x8xf32> to vector<1x8xf32>
    %12 = vector.shape_cast %11 : vector<1x8xf32> to vector<1x1x8xf32>
    %13 = vector.broadcast %10 : vector<2x8x1xf32> to vector<2x8x8xf32>
    %14 = vector.broadcast %12 : vector<1x1x8xf32> to vector<2x8x8xf32>
    %15 = arith.mulf %13, %14 : vector<2x8x8xf32>
    %16 = arith.addf %9, %15 : vector<2x8x8xf32>
    %17 = vector.extract_strided_slice %0 {offsets = [0, 0, 2], sizes = [2, 8, 1], strides = [1, 1, 1]} : vector<2x8x5xf32> to vector<2x8x1xf32>
    %18 = vector.extract_strided_slice %1 {offsets = [2, 0], sizes = [1, 8], strides = [1, 1]} : vector<5x8xf32> to vector<1x8xf32>
    %19 = vector.shape_cast %18 : vector<1x8xf32> to vector<1x1x8xf32>
    %20 = vector.broadcast %17 : vector<2x8x1xf32> to vector<2x8x8xf32>
    %21 = vector.broadcast %19 : vector<1x1x8xf32> to vector<2x8x8xf32>
    %22 = arith.mulf %20, %21 : vector<2x8x8xf32>
    %23 = arith.addf %16, %22 : vector<2x8x8xf32>
    %24 = vector.extract_strided_slice %0 {offsets = [0, 0, 3], sizes = [2, 8, 1], strides = [1, 1, 1]} : vector<2x8x5xf32> to vector<2x8x1xf32>
    %25 = vector.extract_strided_slice %1 {offsets = [3, 0], sizes = [1, 8], strides = [1, 1]} : vector<5x8xf32> to vector<1x8xf32>
    %26 = vector.shape_cast %25 : vector<1x8xf32> to vector<1x1x8xf32>
    %27 = vector.broadcast %24 : vector<2x8x1xf32> to vector<2x8x8xf32>
    %28 = vector.broadcast %26 : vector<1x1x8xf32> to vector<2x8x8xf32>
    %29 = arith.mulf %27, %28 : vector<2x8x8xf32>
    %30 = arith.addf %23, %29 : vector<2x8x8xf32>
    %31 = vector.extract_strided_slice %0 {offsets = [0, 0, 4], sizes = [2, 8, 1], strides = [1, 1, 1]} : vector<2x8x5xf32> to vector<2x8x1xf32>
    %32 = vector.extract_strided_slice %1 {offsets = [4, 0], sizes = [1, 8], strides = [1, 1]} : vector<5x8xf32> to vector<1x8xf32>
    %33 = vector.shape_cast %32 : vector<1x8xf32> to vector<1x1x8xf32>
    %34 = vector.broadcast %31 : vector<2x8x1xf32> to vector<2x8x8xf32>
    %35 = vector.broadcast %33 : vector<1x1x8xf32> to vector<2x8x8xf32>
    %36 = arith.mulf %34, %35 : vector<2x8x8xf32>
    %37 = arith.addf %30, %36 : vector<2x8x8xf32>
    %38 = vector.shape_cast %3 : vector<1x8xf32> to vector<1x1x8xf32>
    %39 = vector.broadcast %38 : vector<1x1x8xf32> to vector<2x8x8xf32>
    %40 = arith.addf %37, %39 : vector<2x8x8xf32>
    %cst = arith.constant 0.000000e+00 : f32
    %41 = vector.broadcast %cst : f32 to vector<2x2xf32>
    %cst_8 = arith.constant 0.000000e+00 : f32
    %42 = vector.broadcast %cst_8 : f32 to vector<2x2xf32>
    %43 = vector.extract_strided_slice %40 {offsets = [0, 0, 0], sizes = [2, 1, 8], strides = [1, 1, 1]} : vector<2x8x8xf32> to vector<2x1x8xf32>
    %44 = vector.shape_cast %43 : vector<2x1x8xf32> to vector<2x8xf32>
    %45 = vector.extract_strided_slice %41 {offsets = [0, 0], sizes = [2, 1], strides = [1, 1]} : vector<2x2xf32> to vector<2x1xf32>
    %46 = vector.extract_strided_slice %2 {offsets = [0, 0], sizes = [1, 8], strides = [1, 1]} : vector<2x8xf32> to vector<1x8xf32>
    %47 = vector.broadcast %45 : vector<2x1xf32> to vector<2x8xf32>
    %48 = vector.broadcast %46 : vector<1x8xf32> to vector<2x8xf32>
    %49 = arith.mulf %47, %48 : vector<2x8xf32>
    %50 = arith.addf %44, %49 : vector<2x8xf32>
    %51 = vector.extract_strided_slice %41 {offsets = [0, 1], sizes = [2, 1], strides = [1, 1]} : vector<2x2xf32> to vector<2x1xf32>
    %52 = vector.extract_strided_slice %2 {offsets = [1, 0], sizes = [1, 8], strides = [1, 1]} : vector<2x8xf32> to vector<1x8xf32>
    %53 = vector.broadcast %51 : vector<2x1xf32> to vector<2x8xf32>
    %54 = vector.broadcast %52 : vector<1x8xf32> to vector<2x8xf32>
    %55 = arith.mulf %53, %54 : vector<2x8xf32>
    %56 = arith.addf %50, %55 : vector<2x8xf32>
    %57 = arith.negf %56 : vector<2x8xf32>
    %58 = math.exp %57 : vector<2x8xf32>
    %cst_9 = arith.constant 1.000000e+00 : f32
    %59 = vector.broadcast %cst_9 : f32 to vector<2x8xf32>
    %60 = arith.addf %59, %58 : vector<2x8xf32>
    %61 = arith.divf %59, %60 : vector<2x8xf32>
    %62 = math.tanh %56 : vector<2x8xf32>
    %63 = vector.extract_strided_slice %61 {offsets = [0, 0], sizes = [2, 2], strides = [1, 1]} : vector<2x8xf32> to vector<2x2xf32>
    %64 = vector.extract_strided_slice %61 {offsets = [0, 2], sizes = [2, 2], strides = [1, 1]} : vector<2x8xf32> to vector<2x2xf32>
    %65 = vector.extract_strided_slice %62 {offsets = [0, 4], sizes = [2, 2], strides = [1, 1]} : vector<2x8xf32> to vector<2x2xf32>
    %66 = vector.extract_strided_slice %61 {offsets = [0, 6], sizes = [2, 2], strides = [1, 1]} : vector<2x8xf32> to vector<2x2xf32>
    %67 = arith.mulf %64, %42 : vector<2x2xf32>
    %68 = arith.mulf %63, %65 : vector<2x2xf32>
    %69 = arith.addf %67, %68 : vector<2x2xf32>
    %70 = math.tanh %69 : vector<2x2xf32>
    %71 = arith.mulf %66, %70 : vector<2x2xf32>
    %72 = vector.extract_strided_slice %40 {offsets = [0, 1, 0], sizes = [2, 1, 8], strides = [1, 1, 1]} : vector<2x8x8xf32> to vector<2x1x8xf32>
    %73 = vector.shape_cast %72 : vector<2x1x8xf32> to vector<2x8xf32>
    %74 = vector.extract_strided_slice %71 {offsets = [0, 0], sizes = [2, 1], strides = [1, 1]} : vector<2x2xf32> to vector<2x1xf32>
    %75 = vector.extract_strided_slice %2 {offsets = [0, 0], sizes = [1, 8], strides = [1, 1]} : vector<2x8xf32> to vector<1x8xf32>
    %76 = vector.broadcast %74 : vector<2x1xf32> to vector<2x8xf32>
    %77 = vector.broadcast %75 : vector<1x8xf32> to vector<2x8xf32>
    %78 = arith.mulf %76, %77 : vector<2x8xf32>
    %79 = arith.addf %73, %78 : vector<2x8xf32>
    %80 = vector.extract_strided_slice %71 {offsets = [0, 1], sizes = [2, 1], strides = [1, 1]} : vector<2x2xf32> to vector<2x1xf32>
    %81 = vector.extract_strided_slice %2 {offsets = [1, 0], sizes = [1, 8], strides = [1, 1]} : vector<2x8xf32> to vector<1x8xf32>
    %82 = vector.broadcast %80 : vector<2x1xf32> to vector<2x8xf32>
    %83 = vector.broadcast %81 : vector<1x8xf32> to vector<2x8xf32>
    %84 = arith.mulf %82, %83 : vector<2x8xf32>
    %85 = arith.addf %79, %84 : vector<2x8xf32>
    %86 = arith.negf %85 : vector<2x8xf32>
    %87 = math.exp %86 : vector<2x8xf32>
    %cst_10 = arith.constant 1.000000e+00 : f32
    %88 = vector.broadcast %cst_10 : f32 to vector<2x8xf32>
    %89 = arith.addf %88, %87 : vector<2x8xf32>
    %90 = arith.divf %88, %89 : vector<2x8xf32>
    %91 = math.tanh %85 : vector<2x8xf32>
    %92 = vector.extract_strided_slice %90 {offsets = [0, 0], sizes = [2, 2], strides = [1, 1]} : vector<2x8xf32> to vector<2x2xf32>
    %93 = vector.extract_strided_slice %90 {offsets = [0, 2], sizes = [2, 2], strides = [1, 1]} : vector<2x8xf32> to vector<2x2xf32>
    %94 = vector.extract_strided_slice %91 {offsets = [0, 4], sizes = [2, 2], strides = [1, 1]} : vector<2x8xf32> to vector<2x2xf32>
    %95 = vector.extract_strided_slice %90 {offsets = [0, 6], sizes = [2, 2], strides = [1, 1]} : vector<2x8xf32> to vector<2x2xf32>
    %96 = arith.mulf %93, %69 : vector<2x2xf32>
    %97 = arith.mulf %92, %94 : vector<2x2xf32>
    %98 = arith.addf %96, %97 : vector<2x2xf32>
    %99 = math.tanh %98 : vector<2x2xf32>
    %100 = arith.mulf %95, %99 : vector<2x2xf32>
    %101 = vector.extract_strided_slice %40 {offsets = [0, 2, 0], sizes = [2, 1, 8], strides = [1, 1, 1]} : vector<2x8x8xf32> to vector<2x1x8xf32>
    %102 = vector.shape_cast %101 : vector<2x1x8xf32> to vector<2x8xf32>
    %103 = vector.extract_strided_slice %100 {offsets = [0, 0], sizes = [2, 1], strides = [1, 1]} : vector<2x2xf32> to vector<2x1xf32>
    %104 = vector.extract_strided_slice %2 {offsets = [0, 0], sizes = [1, 8], strides = [1, 1]} : vector<2x8xf32> to vector<1x8xf32>
    %105 = vector.broadcast %103 : vector<2x1xf32> to vector<2x8xf32>
    %106 = vector.broadcast %104 : vector<1x8xf32> to vector<2x8xf32>
    %107 = arith.mulf %105, %106 : vector<2x8xf32>
    %108 = arith.addf %102, %107 : vector<2x8xf32>
    %109 = vector.extract_strided_slice %100 {offsets = [0, 1], sizes = [2, 1], strides = [1, 1]} : vector<2x2xf32> to vector<2x1xf32>
    %110 = vector.extract_strided_slice %2 {offsets = [1, 0], sizes = [1, 8], strides = [1, 1]} : vector<2x8xf32> to vector<1x8xf32>
    %111 = vector.broadcast %109 : vector<2x1xf32> to vector<2x8xf32>
    %112 = vector.broadcast %110 : vector<1x8xf32> to vector<2x8xf32>
    %113 = arith.mulf %111, %112 : vector<2x8xf32>
    %114 = arith.addf %108, %113 : vector<2x8xf32>
    %115 = arith.negf %114 : vector<2x8xf32>
    %116 = math.exp %115 : vector<2x8xf32>
    %cst_11 = arith.constant 1.000000e+00 : f32
    %117 = vector.broadcast %cst_11 : f32 to vector<2x8xf32>
    %118 = arith.addf %117, %116 : vector<2x8xf32>
    %119 = arith.divf %117, %118 : vector<2x8xf32>
    %120 = math.tanh %114 : vector<2x8xf32>
    %121 = vector.extract_strided_slice %119 {offsets = [0, 0], sizes = [2, 2], strides = [1, 1]} : vector<2x8xf32> to vector<2x2xf32>
    %122 = vector.extract_strided_slice %119 {offsets = [0, 2], sizes = [2, 2], strides = [1, 1]} : vector<2x8xf32> to vector<2x2xf32>
    %123 = vector.extract_strided_slice %120 {offsets = [0, 4], sizes = [2, 2], strides = [1, 1]} : vector<2x8xf32> to vector<2x2xf32>
    %124 = vector.extract_strided_slice %119 {offsets = [0, 6], sizes = [2, 2], strides = [1, 1]} : vector<2x8xf32> to vector<2x2xf32>
    %125 = arith.mulf %122, %98 : vector<2x2xf32>
    %126 = arith.mulf %121, %123 : vector<2x2xf32>
    %127 = arith.addf %125, %126 : vector<2x2xf32>
    %128 = math.tanh %127 : vector<2x2xf32>
    %129 = arith.mulf %124, %128 : vector<2x2xf32>
    %130 = vector.extract_strided_slice %40 {offsets = [0, 3, 0], sizes = [2, 1, 8], strides = [1, 1, 1]} : vector<2x8x8xf32> to vector<2x1x8xf32>
    %131 = vector.shape_cast %130 : vector<2x1x8xf32> to vector<2x8xf32>
    %132 = vector.extract_strided_slice %129 {offsets = [0, 0], sizes = [2, 1], strides = [1, 1]} : vector<2x2xf32> to vector<2x1xf32>
    %133 = vector.extract_strided_slice %2 {offsets = [0, 0], sizes = [1, 8], strides = [1, 1]} : vector<2x8xf32> to vector<1x8xf32>
    %134 = vector.broadcast %132 : vector<2x1xf32> to vector<2x8xf32>
    %135 = vector.broadcast %133 : vector<1x8xf32> to vector<2x8xf32>
    %136 = arith.mulf %134, %135 : vector<2x8xf32>
    %137 = arith.addf %131, %136 : vector<2x8xf32>
    %138 = vector.extract_strided_slice %129 {offsets = [0, 1], sizes = [2, 1], strides = [1, 1]} : vector<2x2xf32> to vector<2x1xf32>
    %139 = vector.extract_strided_slice %2 {offsets = [1, 0], sizes = [1, 8], strides = [1, 1]} : vector<2x8xf32> to vector<1x8xf32>
    %140 = vector.broadcast %138 : vector<2x1xf32> to vector<2x8xf32>
    %141 = vector.broadcast %139 : vector<1x8xf32> to vector<2x8xf32>
    %142 = arith.mulf %140, %141 : vector<2x8xf32>
    %143 = arith.addf %137, %142 : vector<2x8xf32>
    %144 = arith.negf %143 : vector<2x8xf32>
    %145 = math.exp %144 : vector<2x8xf32>
    %cst_12 = arith.constant 1.000000e+00 : f32
    %146 = vector.broadcast %cst_12 : f32 to vector<2x8xf32>
    %147 = arith.addf %146, %145 : vector<2x8xf32>
    %148 = arith.divf %146, %147 : vector<2x8xf32>
    %149 = math.tanh %143 : vector<2x8xf32>
    %150 = vector.extract_strided_slice %148 {offsets = [0, 0], sizes = [2, 2], strides = [1, 1]} : vector<2x8xf32> to vector<2x2xf32>
    %151 = vector.extract_strided_slice %148 {offsets = [0, 2], sizes = [2, 2], strides = [1, 1]} : vector<2x8xf32> to vector<2x2xf32>
    %152 = vector.extract_strided_slice %149 {offsets = [0, 4], sizes = [2, 2], strides = [1, 1]} : vector<2x8xf32> to vector<2x2xf32>
    %153 = vector.extract_strided_slice %148 {offsets = [0, 6], sizes = [2, 2], strides = [1, 1]} : vector<2x8xf32> to vector<2x2xf32>
    %154 = arith.mulf %151, %127 : vector<2x2xf32>
    %155 = arith.mulf %150, %152 : vector<2x2xf32>
    %156 = arith.addf %154, %155 : vector<2x2xf32>
    %157 = math.tanh %156 : vector<2x2xf32>
    %158 = arith.mulf %153, %157 : vector<2x2xf32>
    %159 = vector.extract_strided_slice %40 {offsets = [0, 4, 0], sizes = [2, 1, 8], strides = [1, 1, 1]} : vector<2x8x8xf32> to vector<2x1x8xf32>
    %160 = vector.shape_cast %159 : vector<2x1x8xf32> to vector<2x8xf32>
    %161 = vector.extract_strided_slice %158 {offsets = [0, 0], sizes = [2, 1], strides = [1, 1]} : vector<2x2xf32> to vector<2x1xf32>
    %162 = vector.extract_strided_slice %2 {offsets = [0, 0], sizes = [1, 8], strides = [1, 1]} : vector<2x8xf32> to vector<1x8xf32>
    %163 = vector.broadcast %161 : vector<2x1xf32> to vector<2x8xf32>
    %164 = vector.broadcast %162 : vector<1x8xf32> to vector<2x8xf32>
    %165 = arith.mulf %163, %164 : vector<2x8xf32>
    %166 = arith.addf %160, %165 : vector<2x8xf32>
    %167 = vector.extract_strided_slice %158 {offsets = [0, 1], sizes = [2, 1], strides = [1, 1]} : vector<2x2xf32> to vector<2x1xf32>
    %168 = vector.extract_strided_slice %2 {offsets = [1, 0], sizes = [1, 8], strides = [1, 1]} : vector<2x8xf32> to vector<1x8xf32>
    %169 = vector.broadcast %167 : vector<2x1xf32> to vector<2x8xf32>
    %170 = vector.broadcast %168 : vector<1x8xf32> to vector<2x8xf32>
    %171 = arith.mulf %169, %170 : vector<2x8xf32>
    %172 = arith.addf %166, %171 : vector<2x8xf32>
    %173 = arith.negf %172 : vector<2x8xf32>
    %174 = math.exp %173 : vector<2x8xf32>
    %cst_13 = arith.constant 1.000000e+00 : f32
    %175 = vector.broadcast %cst_13 : f32 to vector<2x8xf32>
    %176 = arith.addf %175, %174 : vector<2x8xf32>
    %177 = arith.divf %175, %176 : vector<2x8xf32>
    %178 = math.tanh %172 : vector<2x8xf32>
    %179 = vector.extract_strided_slice %177 {offsets = [0, 0], sizes = [2, 2], strides = [1, 1]} : vector<2x8xf32> to vector<2x2xf32>
    %180 = vector.extract_strided_slice %177 {offsets = [0, 2], sizes = [2, 2], strides = [1, 1]} : vector<2x8xf32> to vector<2x2xf32>
    %181 = vector.extract_strided_slice %178 {offsets = [0, 4], sizes = [2, 2], strides = [1, 1]} : vector<2x8xf32> to vector<2x2xf32>
    %182 = vector.extract_strided_slice %177 {offsets = [0, 6], sizes = [2, 2], strides = [1, 1]} : vector<2x8xf32> to vector<2x2xf32>
    %183 = arith.mulf %180, %156 : vector<2x2xf32>
    %184 = arith.mulf %179, %181 : vector<2x2xf32>
    %185 = arith.addf %183, %184 : vector<2x2xf32>
    %186 = math.tanh %185 : vector<2x2xf32>
    %187 = arith.mulf %182, %186 : vector<2x2xf32>
    %188 = vector.extract_strided_slice %40 {offsets = [0, 5, 0], sizes = [2, 1, 8], strides = [1, 1, 1]} : vector<2x8x8xf32> to vector<2x1x8xf32>
    %189 = vector.shape_cast %188 : vector<2x1x8xf32> to vector<2x8xf32>
    %190 = vector.extract_strided_slice %187 {offsets = [0, 0], sizes = [2, 1], strides = [1, 1]} : vector<2x2xf32> to vector<2x1xf32>
    %191 = vector.extract_strided_slice %2 {offsets = [0, 0], sizes = [1, 8], strides = [1, 1]} : vector<2x8xf32> to vector<1x8xf32>
    %192 = vector.broadcast %190 : vector<2x1xf32> to vector<2x8xf32>
    %193 = vector.broadcast %191 : vector<1x8xf32> to vector<2x8xf32>
    %194 = arith.mulf %192, %193 : vector<2x8xf32>
    %195 = arith.addf %189, %194 : vector<2x8xf32>
    %196 = vector.extract_strided_slice %187 {offsets = [0, 1], sizes = [2, 1], strides = [1, 1]} : vector<2x2xf32> to vector<2x1xf32>
    %197 = vector.extract_strided_slice %2 {offsets = [1, 0], sizes = [1, 8], strides = [1, 1]} : vector<2x8xf32> to vector<1x8xf32>
    %198 = vector.broadcast %196 : vector<2x1xf32> to vector<2x8xf32>
    %199 = vector.broadcast %197 : vector<1x8xf32> to vector<2x8xf32>
    %200 = arith.mulf %198, %199 : vector<2x8xf32>
    %201 = arith.addf %195, %200 : vector<2x8xf32>
    %202 = arith.negf %201 : vector<2x8xf32>
    %203 = math.exp %202 : vector<2x8xf32>
    %cst_14 = arith.constant 1.000000e+00 : f32
    %204 = vector.broadcast %cst_14 : f32 to vector<2x8xf32>
    %205 = arith.addf %204, %203 : vector<2x8xf32>
    %206 = arith.divf %204, %205 : vector<2x8xf32>
    %207 = math.tanh %201 : vector<2x8xf32>
    %208 = vector.extract_strided_slice %206 {offsets = [0, 0], sizes = [2, 2], strides = [1, 1]} : vector<2x8xf32> to vector<2x2xf32>
    %209 = vector.extract_strided_slice %206 {offsets = [0, 2], sizes = [2, 2], strides = [1, 1]} : vector<2x8xf32> to vector<2x2xf32>
    %210 = vector.extract_strided_slice %207 {offsets = [0, 4], sizes = [2, 2], strides = [1, 1]} : vector<2x8xf32> to vector<2x2xf32>
    %211 = vector.extract_strided_slice %206 {offsets = [0, 6], sizes = [2, 2], strides = [1, 1]} : vector<2x8xf32> to vector<2x2xf32>
    %212 = arith.mulf %209, %185 : vector<2x2xf32>
    %213 = arith.mulf %208, %210 : vector<2x2xf32>
    %214 = arith.addf %212, %213 : vector<2x2xf32>
    %215 = math.tanh %214 : vector<2x2xf32>
    %216 = arith.mulf %211, %215 : vector<2x2xf32>
    %217 = vector.extract_strided_slice %40 {offsets = [0, 6, 0], sizes = [2, 1, 8], strides = [1, 1, 1]} : vector<2x8x8xf32> to vector<2x1x8xf32>
    %218 = vector.shape_cast %217 : vector<2x1x8xf32> to vector<2x8xf32>
    %219 = vector.extract_strided_slice %216 {offsets = [0, 0], sizes = [2, 1], strides = [1, 1]} : vector<2x2xf32> to vector<2x1xf32>
    %220 = vector.extract_strided_slice %2 {offsets = [0, 0], sizes = [1, 8], strides = [1, 1]} : vector<2x8xf32> to vector<1x8xf32>
    %221 = vector.broadcast %219 : vector<2x1xf32> to vector<2x8xf32>
    %222 = vector.broadcast %220 : vector<1x8xf32> to vector<2x8xf32>
    %223 = arith.mulf %221, %222 : vector<2x8xf32>
    %224 = arith.addf %218, %223 : vector<2x8xf32>
    %225 = vector.extract_strided_slice %216 {offsets = [0, 1], sizes = [2, 1], strides = [1, 1]} : vector<2x2xf32> to vector<2x1xf32>
    %226 = vector.extract_strided_slice %2 {offsets = [1, 0], sizes = [1, 8], strides = [1, 1]} : vector<2x8xf32> to vector<1x8xf32>
    %227 = vector.broadcast %225 : vector<2x1xf32> to vector<2x8xf32>
    %228 = vector.broadcast %226 : vector<1x8xf32> to vector<2x8xf32>
    %229 = arith.mulf %227, %228 : vector<2x8xf32>
    %230 = arith.addf %224, %229 : vector<2x8xf32>
    %231 = arith.negf %230 : vector<2x8xf32>
    %232 = math.exp %231 : vector<2x8xf32>
    %cst_15 = arith.constant 1.000000e+00 : f32
    %233 = vector.broadcast %cst_15 : f32 to vector<2x8xf32>
    %234 = arith.addf %233, %232 : vector<2x8xf32>
    %235 = arith.divf %233, %234 : vector<2x8xf32>
    %236 = math.tanh %230 : vector<2x8xf32>
    %237 = vector.extract_strided_slice %235 {offsets = [0, 0], sizes = [2, 2], strides = [1, 1]} : vector<2x8xf32> to vector<2x2xf32>
    %238 = vector.extract_strided_slice %235 {offsets = [0, 2], sizes = [2, 2], strides = [1, 1]} : vector<2x8xf32> to vector<2x2xf32>
    %239 = vector.extract_strided_slice %236 {offsets = [0, 4], sizes = [2, 2], strides = [1, 1]} : vector<2x8xf32> to vector<2x2xf32>
    %240 = vector.extract_strided_slice %235 {offsets = [0, 6], sizes = [2, 2], strides = [1, 1]} : vector<2x8xf32> to vector<2x2xf32>
    %241 = arith.mulf %238, %214 : vector<2x2xf32>
    %242 = arith.mulf %237, %239 : vector<2x2xf32>
    %243 = arith.addf %241, %242 : vector<2x2xf32>
    %244 = math.tanh %243 : vector<2x2xf32>
    %245 = arith.mulf %240, %244 : vector<2x2xf32>
    %246 = vector.extract_strided_slice %40 {offsets = [0, 7, 0], sizes = [2, 1, 8], strides = [1, 1, 1]} : vector<2x8x8xf32> to vector<2x1x8xf32>
    %247 = vector.shape_cast %246 : vector<2x1x8xf32> to vector<2x8xf32>
    %248 = vector.extract_strided_slice %245 {offsets = [0, 0], sizes = [2, 1], strides = [1, 1]} : vector<2x2xf32> to vector<2x1xf32>
    %249 = vector.extract_strided_slice %2 {offsets = [0, 0], sizes = [1, 8], strides = [1, 1]} : vector<2x8xf32> to vector<1x8xf32>
    %250 = vector.broadcast %248 : vector<2x1xf32> to vector<2x8xf32>
    %251 = vector.broadcast %249 : vector<1x8xf32> to vector<2x8xf32>
    %252 = arith.mulf %250, %251 : vector<2x8xf32>
    %253 = arith.addf %247, %252 : vector<2x8xf32>
    %254 = vector.extract_strided_slice %245 {offsets = [0, 1], sizes = [2, 1], strides = [1, 1]} : vector<2x2xf32> to vector<2x1xf32>
    %255 = vector.extract_strided_slice %2 {offsets = [1, 0], sizes = [1, 8], strides = [1, 1]} : vector<2x8xf32> to vector<1x8xf32>
    %256 = vector.broadcast %254 : vector<2x1xf32> to vector<2x8xf32>
    %257 = vector.broadcast %255 : vector<1x8xf32> to vector<2x8xf32>
    %258 = arith.mulf %256, %257 : vector<2x8xf32>
    %259 = arith.addf %253, %258 : vector<2x8xf32>
    %260 = arith.negf %259 : vector<2x8xf32>
    %261 = math.exp %260 : vector<2x8xf32>
    %cst_16 = arith.constant 1.000000e+00 : f32
    %262 = vector.broadcast %cst_16 : f32 to vector<2x8xf32>
    %263 = arith.addf %262, %261 : vector<2x8xf32>
    %264 = arith.divf %262, %263 : vector<2x8xf32>
    %265 = math.tanh %259 : vector<2x8xf32>
    %266 = vector.extract_strided_slice %264 {offsets = [0, 0], sizes = [2, 2], strides = [1, 1]} : vector<2x8xf32> to vector<2x2xf32>
    %267 = vector.extract_strided_slice %264 {offsets = [0, 2], sizes = [2, 2], strides = [1, 1]} : vector<2x8xf32> to vector<2x2xf32>
    %268 = vector.extract_strided_slice %265 {offsets = [0, 4], sizes = [2, 2], strides = [1, 1]} : vector<2x8xf32> to vector<2x2xf32>
    %269 = vector.extract_strided_slice %264 {offsets = [0, 6], sizes = [2, 2], strides = [1, 1]} : vector<2x8xf32> to vector<2x2xf32>
    %270 = arith.mulf %267, %243 : vector<2x2xf32>
    %271 = arith.mulf %266, %268 : vector<2x2xf32>
    %272 = arith.addf %270, %271 : vector<2x2xf32>
    %273 = math.tanh %272 : vector<2x2xf32>
    %274 = arith.mulf %269, %273 : vector<2x2xf32>
    %cst_17 = arith.constant 0.000000e+00 : f32
    %275 = vector.broadcast %cst_17 : f32 to vector<2x2xf32>
    %276 = arith.maximumf %274, %275 : vector<2x2xf32>
    %277 = vector.extract_strided_slice %276 {offsets = [0, 0], sizes = [2, 1], strides = [1, 1]} : vector<2x2xf32> to vector<2x1xf32>
    %c0_18 = arith.constant 0 : index
    %c0_19 = arith.constant 0 : index
    %278 = vector.load %arg4[%c0_18, %c0_19] : memref<2x128xf32, #tpu.memory_space<vmem>>, vector<1x128xf32>
    %279 = vector.broadcast %277 : vector<2x1xf32> to vector<2x128xf32>
    %280 = vector.broadcast %278 : vector<1x128xf32> to vector<2x128xf32>
    %281 = arith.mulf %279, %280 : vector<2x128xf32>
    %282 = vector.extract_strided_slice %276 {offsets = [0, 1], sizes = [2, 1], strides = [1, 1]} : vector<2x2xf32> to vector<2x1xf32>
    %c1 = arith.constant 1 : index
    %c0_20 = arith.constant 0 : index
    %283 = vector.load %arg4[%c1, %c0_20] : memref<2x128xf32, #tpu.memory_space<vmem>>, vector<1x128xf32>
    %284 = vector.broadcast %282 : vector<2x1xf32> to vector<2x128xf32>
    %285 = vector.broadcast %283 : vector<1x128xf32> to vector<2x128xf32>
    %286 = arith.mulf %284, %285 : vector<2x128xf32>
    %287 = arith.addf %281, %286 : vector<2x128xf32>
    %c0_21 = arith.constant 0 : index
    %c0_22 = arith.constant 0 : index
    %288 = vector.load %arg5[%c0_21, %c0_22] : memref<1x128xf32, #tpu.memory_space<vmem>>, vector<1x128xf32>
    %289 = vector.broadcast %288 : vector<1x128xf32> to vector<2x128xf32>
    %290 = arith.addf %287, %289 : vector<2x128xf32>
    %cst_23 = arith.constant 0.000000e+00 : f32
    %291 = vector.broadcast %cst_23 : f32 to vector<2x128xf32>
    %292 = arith.maximumf %290, %291 : vector<2x128xf32>
    %c0_24 = arith.constant 0 : index
    %c0_25 = arith.constant 0 : index
    %293 = vector.load %arg6[%c0_24, %c0_25] : memref<1x128xf32, #tpu.memory_space<vmem>>, vector<1x128xf32>
    %294 = vector.broadcast %293 : vector<1x128xf32> to vector<2x128xf32>
    %295 = arith.mulf %292, %294 : vector<2x128xf32>
    %cst_26 = arith.constant dense<0.000000e+00> : vector<2xf32>
    %296 = vector.multi_reduction <add>, %295, %cst_26 [1] : vector<2x128xf32> to vector<2xf32>
    %297 = vector.shape_cast %296 : vector<2xf32> to vector<2x1xf32>
    %c0_27 = arith.constant 0 : index
    %c0_28 = arith.constant 0 : index
    %298 = vector.load %arg7[%c0_27, %c0_28] : memref<1x1xf32, #tpu.memory_space<vmem>>, vector<1x1xf32>
    %299 = vector.broadcast %298 : vector<1x1xf32> to vector<2x1xf32>
    %300 = arith.addf %297, %299 : vector<2x1xf32>
    %c0_29 = arith.constant 0 : index
    %c0_30 = arith.constant 0 : index
    %301 = vector.load %arg8[%c0_29, %c0_30] : memref<2x1xf32, #tpu.memory_space<vmem>>, vector<2x1xf32>
    tpu.vector_store %arg8[%c0_29, %c0_30], %300 {strides = array<i32>} : memref<2x1xf32, #tpu.memory_space<vmem>>, vector<2x1xf32>,
    return
  }
}

</mosaic_0001>

<llo_original>
// kernel: lstm1_forward.1
$region0: #{lstm1_forward.1}
  #allocation0 [shape = 'u32[]', space=smem, size = 0x4, offset = 0x4, fixed_abs, tag = 'smem constant byte address 0x4 - core index']
  #allocation1 [shape = 'u32[144,128]{1,0:T(1,128)}', space=vmem, size = 0x12000, scoped, tag = 'internal scratch']
  #allocation2 [shape = 'f32[1,1]{1,0:T(1,128)S(1)}', space=vmem, size = 0x200, scoped, tag = 'scoped memory for lstm1_forward.1']
  %s0 = inlined_call_operand.vmem [shape: f32[2,8,5], index: 0, kind: input, shape index: {}]
  %s1 = inlined_call_operand.vmem [shape: f32[5,8], index: 1, kind: input, shape index: {}]
  %s2 = inlined_call_operand.vmem [shape: f32[2,8], index: 2, kind: input, shape index: {}]
  %s3 = inlined_call_operand.vmem [shape: f32[1,8], index: 3, kind: input, shape index: {}]
  %s4 = inlined_call_operand.vmem [shape: f32[2,128], index: 4, kind: input, shape index: {}]
  %s5 = inlined_call_operand.vmem [shape: f32[1,128], index: 5, kind: input, shape index: {}]
  %s6 = inlined_call_operand.vmem [shape: f32[1,128], index: 6, kind: input, shape index: {}]
  %s7 = inlined_call_operand.<no memory space> [shape: f32[1,1], index: 7, kind: input, shape index: {}]
  %s8 = inlined_call_operand.vmem [shape: f32[2,1], index: 8, kind: output, shape index: {}]
  %s9 = sld [smem:[#allocation0]]
  $region42: #{lstm1_forward.1} parent=0
    _
  %s11 = ssub.s32 1, %s9
  %s12 = scalar_select 0, %s11, %s9
  %v13 = vstv %s7
  %14 = vst [vmem:[#allocation2] sm:$0x1] %v13
  // Predicated region
  $region2: #{lstm1_forward.1} parent=0 // pred_check
    _
  $region3: #{lstm1_forward.1} parent=0 // pred_check_branch
    %16 = sbr.rel (0) target = $region5
  $region4: #{lstm1_forward.1} parent=0 // pred_region
    _
  $region5: #{lstm1_forward.1} parent=0 // pred_fallthru
    _
  // Predicated region
  $region6: #{lstm1_forward.1} parent=0 // pred_check
    _
  $region7: #{lstm1_forward.1} parent=0 // pred_check_branch
    %18 = sbr.rel (0) target = $region9
  $region8: #{lstm1_forward.1} parent=0 // pred_region
    _
  $region9: #{lstm1_forward.1} parent=0 // pred_fallthru
    _
  // Predicated region
  $region10: #{lstm1_forward.1} parent=0 // pred_check
    _
  $region11: #{lstm1_forward.1} parent=0 // pred_check_branch
    %20 = sbr.rel (0) target = $region13
  $region12: #{lstm1_forward.1} parent=0 // pred_region
    _
  $region13: #{lstm1_forward.1} parent=0 // pred_fallthru
    _
  // Predicated region
  $region14: #{lstm1_forward.1} parent=0 // pred_check
    _
  $region15: #{lstm1_forward.1} parent=0 // pred_check_branch
    %22 = sbr.rel (0) target = $region17
  $region16: #{lstm1_forward.1} parent=0 // pred_region
    _
  $region17: #{lstm1_forward.1} parent=0 // pred_fallthru
    _
  // Predicated region
  $region18: #{lstm1_forward.1} parent=0 // pred_check
    _
  $region19: #{lstm1_forward.1} parent=0 // pred_check_branch
    %24 = sbr.rel (0) target = $region21
  $region20: #{lstm1_forward.1} parent=0 // pred_region
    _
  $region21: #{lstm1_forward.1} parent=0 // pred_fallthru
    _
  // Predicated region
  $region22: #{lstm1_forward.1} parent=0 // pred_check
    _
  $region23: #{lstm1_forward.1} parent=0 // pred_check_branch
    %26 = sbr.rel (0) target = $region25
  $region24: #{lstm1_forward.1} parent=0 // pred_region
    _
  $region25: #{lstm1_forward.1} parent=0 // pred_fallthru
    _
  // Predicated region
  $region26: #{lstm1_forward.1} parent=0 // pred_check
    _
  $region27: #{lstm1_forward.1} parent=0 // pred_check_branch
    %28 = sbr.rel (0) target = $region29
  $region28: #{lstm1_forward.1} parent=0 // pred_region
    _
  $region29: #{lstm1_forward.1} parent=0 // pred_fallthru
    _
  // Predicated region
  $region30: #{lstm1_forward.1} parent=0 // pred_check
    _
  $region31: #{lstm1_forward.1} parent=0 // pred_check_branch
    %30 = sbr.rel (0) target = $region33
  $region32: #{lstm1_forward.1} parent=0 // pred_region
    _
  $region33: #{lstm1_forward.1} parent=0 // pred_fallthru
    _
  %v31 = vld [vmem:[%s0] sm:$0xff]
  %v32 = vld [vmem:[%s0 + $0x8] sm:$0xff]
  %v33 = vld [vmem:[%s1] sm:$0x1f]
  %v34 = vld [vmem:[%s2] sm:$0x3]
  %v35 = vld [vmem:[%s3] sm:$0x1]
  %37 = vset.pattern.permute.xlu0 0
  %38 = vperm.xlu0 %37, %v31
  %v39 = vpop.permute.xlu0 %38
  %42 = vset.pattern.permute.xlu0 0
  %43 = vperm.xlu0 %42, %v32
  %v44 = vpop.permute.xlu0 %43
  %v46 = vlaneseq
  %v47 = vshrl.u32 %v46, 7
  %v48 = vsub.s32 0, %v47
  %v49 = vrot.slane %v33, %v48
  %v50 = vmul.f32 %v39, %v49
  %v51 = vmul.f32 %v44, %v49
  %52 = vset.pattern.permute.xlu0 1
  %53 = vperm.xlu0 %52, %v31
  %v54 = vpop.permute.xlu0 %53
  %56 = vset.pattern.permute.xlu0 1
  %57 = vperm.xlu0 %56, %v32
  %v58 = vpop.permute.xlu0 %57
  %v60 = vlaneseq
  %v61 = vshrl.u32 %v60, 7
  %v62 = vsub.s32 1, %v61
  %v63 = vrot.slane %v33, %v62
  %v64 = vmul.f32 %v54, %v63
  %v65 = vmul.f32 %v58, %v63
  %v66 = vadd.f32 %v50, %v64
  %v67 = vadd.f32 %v51, %v65
  %68 = vset.pattern.permute.xlu0 2
  %69 = vperm.xlu0 %68, %v31
  %v70 = vpop.permute.xlu0 %69
  %72 = vset.pattern.permute.xlu0 2
  %73 = vperm.xlu0 %72, %v32
  %v74 = vpop.permute.xlu0 %73
  %v76 = vlaneseq
  %v77 = vshrl.u32 %v76, 7
  %v78 = vsub.s32 2, %v77
  %v79 = vrot.slane %v33, %v78
  %v80 = vmul.f32 %v70, %v79
  %v81 = vmul.f32 %v74, %v79
  %v82 = vadd.f32 %v66, %v80
  %v83 = vadd.f32 %v67, %v81
  %84 = vset.pattern.permute.xlu0 3
  %85 = vperm.xlu0 %84, %v31
  %v86 = vpop.permute.xlu0 %85
  %88 = vset.pattern.permute.xlu0 3
  %89 = vperm.xlu0 %88, %v32
  %v90 = vpop.permute.xlu0 %89
  %v92 = vlaneseq
  %v93 = vshrl.u32 %v92, 7
  %v94 = vsub.s32 3, %v93
  %v95 = vrot.slane %v33, %v94
  %v96 = vmul.f32 %v86, %v95
  %v97 = vmul.f32 %v90, %v95
  %v98 = vadd.f32 %v82, %v96
  %v99 = vadd.f32 %v83, %v97
  %100 = vset.pattern.permute.xlu0 4
  %101 = vperm.xlu0 %100, %v31
  %v102 = vpop.permute.xlu0 %101
  %104 = vset.pattern.permute.xlu0 4
  %105 = vperm.xlu0 %104, %v32
  %v106 = vpop.permute.xlu0 %105
  %v108 = vlaneseq
  %v109 = vshrl.u32 %v108, 7
  %v110 = vsub.s32 4, %v109
  %v111 = vrot.slane %v33, %v110
  %v112 = vmul.f32 %v102, %v111
  %v113 = vmul.f32 %v106, %v111
  %v114 = vadd.f32 %v98, %v112
  %v115 = vadd.f32 %v99, %v113
  %v117 = vlaneseq
  %v118 = vshrl.u32 %v117, 7
  %v119 = vsub.s32 0, %v118
  %v120 = vrot.slane %v35, %v119
  %v122 = vadd.f32 %v114, %v120
  %v123 = vadd.f32 %v115, %v120
  %v124 = vlaneseq
  %v125 = vshrl.u32 %v124, 7
  %v126 = vsub.s32 0, %v125
  %v127 = vrot.slane %v34, %v126
  %v128 = vmul.f32 %v127, 0.0
  %v129 = vadd.f32 %v122, %v128
  %v130 = vadd.f32 %v123, %v128
  %v131 = vlaneseq
  %v132 = vshrl.u32 %v131, 7
  %v133 = vsub.s32 1, %v132
  %v134 = vrot.slane %v34, %v133
  %v135 = vmul.f32 %v134, 0.0
  %v136 = vadd.f32 %v129, %v135
  %v137 = vadd.f32 %v130, %v135
  %v138 = vxor.u32 %v136, 2147483648
  %v139 = vxor.u32 %v137, 2147483648
  %v140 = vmul.f32 %v138, 1.442695
  %v141 = vpow.pop %v140
  %v142 = vmul.f32 %v139, 1.442695
  %v143 = vpow.pop %v142
  %v144 = vadd.f32 %v141, 1.0
  %v145 = vadd.f32 %v143, 1.0
  %v146 = vrcp.pop %v144
  %v147 = vmul.f32 1.0, %v146
  %v148 = vrcp.pop %v145
  %v149 = vmul.f32 1.0, %v148
  %v150 = vtanh.pop %v136
  %v151 = vtanh.pop %v137
  %v152 = vmul.f32 %v147, 0.0
  %v153 = vmul.f32 %v149, 0.0
  %156 = vrot.lane.b32.xlu0 %v150, 124
  %v157 = vpop.permute.xlu0 %156
  %158 = vrot.lane.b32.xlu0 %v151, 124
  %v159 = vpop.permute.xlu0 %158
  %v162 = vmul.f32 %v147, %v157
  %v163 = vmul.f32 %v149, %v159
  %166 = vrot.lane.b32.xlu0 %v162, 2
  %v167 = vpop.permute.xlu0 %166
  %168 = vrot.lane.b32.xlu0 %v163, 2
  %v169 = vpop.permute.xlu0 %168
  %v172 = vadd.f32 %v152, %v167
  %v173 = vadd.f32 %v153, %v169
  %v174 = vtanh.pop %v172
  %v175 = vtanh.pop %v173
  %178 = vrot.lane.b32.xlu0 %v174, 4
  %v179 = vpop.permute.xlu0 %178
  %180 = vrot.lane.b32.xlu0 %v175, 4
  %v181 = vpop.permute.xlu0 %180
  %v184 = vmul.f32 %v147, %v179
  %v185 = vmul.f32 %v149, %v181
  %187 = vset.pattern.permute.xlu0 6
  %188 = vperm.xlu0 %187, %v184
  %v189 = vpop.permute.xlu0 %188
  %192 = vset.pattern.permute.xlu0 6
  %193 = vperm.xlu0 %192, %v185
  %v194 = vpop.permute.xlu0 %193
  %v196 = vmul.f32 %v189, %v127
  %v197 = vmul.f32 %v194, %v127
  %v200 = vrot.slane %v196, 7
  %v201 = vrot.slane %v197, 7
  %v204 = vadd.f32 %v122, %v200
  %v205 = vadd.f32 %v123, %v201
  %206 = vset.pattern.permute.xlu0 7
  %207 = vperm.xlu0 %206, %v184
  %v208 = vpop.permute.xlu0 %207
  %210 = vset.pattern.permute.xlu0 7
  %211 = vperm.xlu0 %210, %v185
  %v212 = vpop.permute.xlu0 %211
  %v214 = vmul.f32 %v208, %v134
  %v215 = vmul.f32 %v212, %v134
  %v218 = vrot.slane %v214, 7
  %v219 = vrot.slane %v215, 7
  %v222 = vadd.f32 %v204, %v218
  %v223 = vadd.f32 %v205, %v219
  %v224 = vxor.u32 %v222, 2147483648
  %v225 = vxor.u32 %v223, 2147483648
  %v226 = vmul.f32 %v224, 1.442695
  %v227 = vpow.pop %v226
  %v228 = vmul.f32 %v225, 1.442695
  %v229 = vpow.pop %v228
  %v230 = vadd.f32 %v227, 1.0
  %v231 = vadd.f32 %v229, 1.0
  %v232 = vrcp.pop %v230
  %v233 = vmul.f32 1.0, %v232
  %v234 = vrcp.pop %v231
  %v235 = vmul.f32 1.0, %v234
  %v236 = vtanh.pop %v222
  %v237 = vtanh.pop %v223
  %v240 = vrot.slane %v172, 7
  %v241 = vrot.slane %v173, 7
  %v244 = vmul.f32 %v233, %v240
  %v245 = vmul.f32 %v235, %v241
  %248 = vrot.lane.b32.xlu0 %v236, 124
  %v249 = vpop.permute.xlu0 %248
  %250 = vrot.lane.b32.xlu0 %v237, 124
  %v251 = vpop.permute.xlu0 %250
  %v254 = vmul.f32 %v233, %v249
  %v255 = vmul.f32 %v235, %v251
  %258 = vrot.lane.b32.xlu0 %v254, 2
  %v259 = vpop.permute.xlu0 %258
  %260 = vrot.lane.b32.xlu0 %v255, 2
  %v261 = vpop.permute.xlu0 %260
  %v264 = vadd.f32 %v244, %v259
  %v265 = vadd.f32 %v245, %v261
  %v266 = vtanh.pop %v264
  %v267 = vtanh.pop %v265
  %270 = vrot.lane.b32.xlu0 %v266, 4
  %v271 = vpop.permute.xlu0 %270
  %272 = vrot.lane.b32.xlu0 %v267, 4
  %v273 = vpop.permute.xlu0 %272
  %v276 = vmul.f32 %v233, %v271
  %v277 = vmul.f32 %v235, %v273
  %279 = vset.pattern.permute.xlu0 6
  %280 = vperm.xlu0 %279, %v276
  %v281 = vpop.permute.xlu0 %280
  %284 = vset.pattern.permute.xlu0 6
  %285 = vperm.xlu0 %284, %v277
  %v286 = vpop.permute.xlu0 %285
  %v288 = vmul.f32 %v281, %v127
  %v289 = vmul.f32 %v286, %v127
  %v292 = vrot.slane %v288, 7
  %v293 = vrot.slane %v289, 7
  %v296 = vadd.f32 %v122, %v292
  %v297 = vadd.f32 %v123, %v293
  %298 = vset.pattern.permute.xlu0 7
  %299 = vperm.xlu0 %298, %v276
  %v300 = vpop.permute.xlu0 %299
  %302 = vset.pattern.permute.xlu0 7
  %303 = vperm.xlu0 %302, %v277
  %v304 = vpop.permute.xlu0 %303
  %v306 = vmul.f32 %v300, %v134
  %v307 = vmul.f32 %v304, %v134
  %v310 = vrot.slane %v306, 7
  %v311 = vrot.slane %v307, 7
  %v314 = vadd.f32 %v296, %v310
  %v315 = vadd.f32 %v297, %v311
  %v316 = vxor.u32 %v314, 2147483648
  %v317 = vxor.u32 %v315, 2147483648
  %v318 = vmul.f32 %v316, 1.442695
  %v319 = vpow.pop %v318
  %v320 = vmul.f32 %v317, 1.442695
  %v321 = vpow.pop %v320
  %v322 = vadd.f32 %v319, 1.0
  %v323 = vadd.f32 %v321, 1.0
  %v324 = vrcp.pop %v322
  %v325 = vmul.f32 1.0, %v324
  %v326 = vrcp.pop %v323
  %v327 = vmul.f32 1.0, %v326
  %v328 = vtanh.pop %v314
  %v329 = vtanh.pop %v315
  %v332 = vrot.slane %v264, 7
  %v333 = vrot.slane %v265, 7
  %v336 = vmul.f32 %v325, %v332
  %v337 = vmul.f32 %v327, %v333
  %340 = vrot.lane.b32.xlu0 %v328, 124
  %v341 = vpop.permute.xlu0 %340
  %342 = vrot.lane.b32.xlu0 %v329, 124
  %v343 = vpop.permute.xlu0 %342
  %v346 = vmul.f32 %v325, %v341
  %v347 = vmul.f32 %v327, %v343
  %350 = vrot.lane.b32.xlu0 %v346, 2
  %v351 = vpop.permute.xlu0 %350
  %352 = vrot.lane.b32.xlu0 %v347, 2
  %v353 = vpop.permute.xlu0 %352
  %v356 = vadd.f32 %v336, %v351
  %v357 = vadd.f32 %v337, %v353
  %v358 = vtanh.pop %v356
  %v359 = vtanh.pop %v357
  %362 = vrot.lane.b32.xlu0 %v358, 4
  %v363 = vpop.permute.xlu0 %362
  %364 = vrot.lane.b32.xlu0 %v359, 4
  %v365 = vpop.permute.xlu0 %364
  %v368 = vmul.f32 %v325, %v363
  %v369 = vmul.f32 %v327, %v365
  %371 = vset.pattern.permute.xlu0 6
  %372 = vperm.xlu0 %371, %v368
  %v373 = vpop.permute.xlu0 %372
  %376 = vset.pattern.permute.xlu0 6
  %377 = vperm.xlu0 %376, %v369
  %v378 = vpop.permute.xlu0 %377
  %v380 = vmul.f32 %v373, %v127
  %v381 = vmul.f32 %v378, %v127
  %v384 = vrot.slane %v380, 7
  %v385 = vrot.slane %v381, 7
  %v388 = vadd.f32 %v122, %v384
  %v389 = vadd.f32 %v123, %v385
  %390 = vset.pattern.permute.xlu0 7
  %391 = vperm.xlu0 %390, %v368
  %v392 = vpop.permute.xlu0 %391
  %394 = vset.pattern.permute.xlu0 7
  %395 = vperm.xlu0 %394, %v369
  %v396 = vpop.permute.xlu0 %395
  %v398 = vmul.f32 %v392, %v134
  %v399 = vmul.f32 %v396, %v134
  %v402 = vrot.slane %v398, 7
  %v403 = vrot.slane %v399, 7
  %v406 = vadd.f32 %v388, %v402
  %v407 = vadd.f32 %v389, %v403
  %v408 = vxor.u32 %v406, 2147483648
  %v409 = vxor.u32 %v407, 2147483648
  %v410 = vmul.f32 %v408, 1.442695
  %v411 = vpow.pop %v410
  %v412 = vmul.f32 %v409, 1.442695
  %v413 = vpow.pop %v412
  %v414 = vadd.f32 %v411, 1.0
  %v415 = vadd.f32 %v413, 1.0
  %v416 = vrcp.pop %v414
  %v417 = vmul.f32 1.0, %v416
  %v418 = vrcp.pop %v415
  %v419 = vmul.f32 1.0, %v418
  %v420 = vtanh.pop %v406
  %v421 = vtanh.pop %v407
  %v424 = vrot.slane %v356, 7
  %v425 = vrot.slane %v357, 7
  %v428 = vmul.f32 %v417, %v424
  %v429 = vmul.f32 %v419, %v425
  %432 = vrot.lane.b32.xlu0 %v420, 124
  %v433 = vpop.permute.xlu0 %432
  %434 = vrot.lane.b32.xlu0 %v421, 124
  %v435 = vpop.permute.xlu0 %434
  %v438 = vmul.f32 %v417, %v433
  %v439 = vmul.f32 %v419, %v435
  %442 = vrot.lane.b32.xlu0 %v438, 2
  %v443 = vpop.permute.xlu0 %442
  %444 = vrot.lane.b32.xlu0 %v439, 2
  %v445 = vpop.permute.xlu0 %444
  %v448 = vadd.f32 %v428, %v443
  %v449 = vadd.f32 %v429, %v445
  %v450 = vtanh.pop %v448
  %v451 = vtanh.pop %v449
  %454 = vrot.lane.b32.xlu0 %v450, 4
  %v455 = vpop.permute.xlu0 %454
  %456 = vrot.lane.b32.xlu0 %v451, 4
  %v457 = vpop.permute.xlu0 %456
  %v460 = vmul.f32 %v417, %v455
  %v461 = vmul.f32 %v419, %v457
  %463 = vset.pattern.permute.xlu0 6
  %464 = vperm.xlu0 %463, %v460
  %v465 = vpop.permute.xlu0 %464
  %468 = vset.pattern.permute.xlu0 6
  %469 = vperm.xlu0 %468, %v461
  %v470 = vpop.permute.xlu0 %469
  %v472 = vmul.f32 %v465, %v127
  %v473 = vmul.f32 %v470, %v127
  %v476 = vrot.slane %v472, 7
  %v477 = vrot.slane %v473, 7
  %v480 = vadd.f32 %v122, %v476
  %v481 = vadd.f32 %v123, %v477
  %482 = vset.pattern.permute.xlu0 7
  %483 = vperm.xlu0 %482, %v460
  %v484 = vpop.permute.xlu0 %483
  %486 = vset.pattern.permute.xlu0 7
  %487 = vperm.xlu0 %486, %v461
  %v488 = vpop.permute.xlu0 %487
  %v490 = vmul.f32 %v484, %v134
  %v491 = vmul.f32 %v488, %v134
  %v494 = vrot.slane %v490, 7
  %v495 = vrot.slane %v491, 7
  %v498 = vadd.f32 %v480, %v494
  %v499 = vadd.f32 %v481, %v495
  %v500 = vxor.u32 %v498, 2147483648
  %v501 = vxor.u32 %v499, 2147483648
  %v502 = vmul.f32 %v500, 1.442695
  %v503 = vpow.pop %v502
  %v504 = vmul.f32 %v501, 1.442695
  %v505 = vpow.pop %v504
  %v506 = vadd.f32 %v503, 1.0
  %v507 = vadd.f32 %v505, 1.0
  %v508 = vrcp.pop %v506
  %v509 = vmul.f32 1.0, %v508
  %v510 = vrcp.pop %v507
  %v511 = vmul.f32 1.0, %v510
  %v512 = vtanh.pop %v498
  %v513 = vtanh.pop %v499
  %v516 = vrot.slane %v448, 7
  %v517 = vrot.slane %v449, 7
  %v520 = vmul.f32 %v509, %v516
  %v521 = vmul.f32 %v511, %v517
  %524 = vrot.lane.b32.xlu0 %v512, 124
  %v525 = vpop.permute.xlu0 %524
  %526 = vrot.lane.b32.xlu0 %v513, 124
  %v527 = vpop.permute.xlu0 %526
  %v530 = vmul.f32 %v509, %v525
  %v531 = vmul.f32 %v511, %v527
  %534 = vrot.lane.b32.xlu0 %v530, 2
  %v535 = vpop.permute.xlu0 %534
  %536 = vrot.lane.b32.xlu0 %v531, 2
  %v537 = vpop.permute.xlu0 %536
  %v540 = vadd.f32 %v520, %v535
  %v541 = vadd.f32 %v521, %v537
  %v542 = vtanh.pop %v540
  %v543 = vtanh.pop %v541
  %546 = vrot.lane.b32.xlu0 %v542, 4
  %v547 = vpop.permute.xlu0 %546
  %548 = vrot.lane.b32.xlu0 %v543, 4
  %v549 = vpop.permute.xlu0 %548
  %v552 = vmul.f32 %v509, %v547
  %v553 = vmul.f32 %v511, %v549
  %555 = vset.pattern.permute.xlu0 6
  %556 = vperm.xlu0 %555, %v552
  %v557 = vpop.permute.xlu0 %556
  %560 = vset.pattern.permute.xlu0 6
  %561 = vperm.xlu0 %560, %v553
  %v562 = vpop.permute.xlu0 %561
  %v564 = vmul.f32 %v557, %v127
  %v565 = vmul.f32 %v562, %v127
  %v568 = vrot.slane %v564, 7
  %v569 = vrot.slane %v565, 7
  %v572 = vadd.f32 %v122, %v568
  %v573 = vadd.f32 %v123, %v569
  %574 = vset.pattern.permute.xlu0 7
  %575 = vperm.xlu0 %574, %v552
  %v576 = vpop.permute.xlu0 %575
  %578 = vset.pattern.permute.xlu0 7
  %579 = vperm.xlu0 %578, %v553
  %v580 = vpop.permute.xlu0 %579
  %v582 = vmul.f32 %v576, %v134
  %v583 = vmul.f32 %v580, %v134
  %v586 = vrot.slane %v582, 7
  %v587 = vrot.slane %v583, 7
  %v590 = vadd.f32 %v572, %v586
  %v591 = vadd.f32 %v573, %v587
  %v592 = vxor.u32 %v590, 2147483648
  %v593 = vxor.u32 %v591, 2147483648
  %v594 = vmul.f32 %v592, 1.442695
  %v595 = vpow.pop %v594
  %v596 = vmul.f32 %v593, 1.442695
  %v597 = vpow.pop %v596
  %v598 = vadd.f32 %v595, 1.0
  %v599 = vadd.f32 %v597, 1.0
  %v600 = vrcp.pop %v598
  %v601 = vmul.f32 1.0, %v600
  %v602 = vrcp.pop %v599
  %v603 = vmul.f32 1.0, %v602
  %v604 = vtanh.pop %v590
  %v605 = vtanh.pop %v591
  %v608 = vrot.slane %v540, 7
  %v609 = vrot.slane %v541, 7
  %v612 = vmul.f32 %v601, %v608
  %v613 = vmul.f32 %v603, %v609
  %616 = vrot.lane.b32.xlu0 %v604, 124
  %v617 = vpop.permute.xlu0 %616
  %618 = vrot.lane.b32.xlu0 %v605, 124
  %v619 = vpop.permute.xlu0 %618
  %v622 = vmul.f32 %v601, %v617
  %v623 = vmul.f32 %v603, %v619
  %626 = vrot.lane.b32.xlu0 %v622, 2
  %v627 = vpop.permute.xlu0 %626
  %628 = vrot.lane.b32.xlu0 %v623, 2
  %v629 = vpop.permute.xlu0 %628
  %v632 = vadd.f32 %v612, %v627
  %v633 = vadd.f32 %v613, %v629
  %v634 = vtanh.pop %v632
  %v635 = vtanh.pop %v633
  %638 = vrot.lane.b32.xlu0 %v634, 4
  %v639 = vpop.permute.xlu0 %638
  %640 = vrot.lane.b32.xlu0 %v635, 4
  %v641 = vpop.permute.xlu0 %640
  %v644 = vmul.f32 %v601, %v639
  %v645 = vmul.f32 %v603, %v641
  %647 = vset.pattern.permute.xlu0 6
  %648 = vperm.xlu0 %647, %v644
  %v649 = vpop.permute.xlu0 %648
  %652 = vset.pattern.permute.xlu0 6
  %653 = vperm.xlu0 %652, %v645
  %v654 = vpop.permute.xlu0 %653
  %v656 = vmul.f32 %v649, %v127
  %v657 = vmul.f32 %v654, %v127
  %v660 = vrot.slane %v656, 7
  %v661 = vrot.slane %v657, 7
  %v664 = vadd.f32 %v122, %v660
  %v665 = vadd.f32 %v123, %v661
  %666 = vset.pattern.permute.xlu0 7
  %667 = vperm.xlu0 %666, %v644
  %v668 = vpop.permute.xlu0 %667
  %670 = vset.pattern.permute.xlu0 7
  %671 = vperm.xlu0 %670, %v645
  %v672 = vpop.permute.xlu0 %671
  %v674 = vmul.f32 %v668, %v134
  %v675 = vmul.f32 %v672, %v134
  %v678 = vrot.slane %v674, 7
  %v679 = vrot.slane %v675, 7
  %v682 = vadd.f32 %v664, %v678
  %v683 = vadd.f32 %v665, %v679
  %v684 = vxor.u32 %v682, 2147483648
  %v685 = vxor.u32 %v683, 2147483648
  %v686 = vmul.f32 %v684, 1.442695
  %v687 = vpow.pop %v686
  %v688 = vmul.f32 %v685, 1.442695
  %v689 = vpow.pop %v688
  %v690 = vadd.f32 %v687, 1.0
  %v691 = vadd.f32 %v689, 1.0
  %v692 = vrcp.pop %v690
  %v693 = vmul.f32 1.0, %v692
  %v694 = vrcp.pop %v691
  %v695 = vmul.f32 1.0, %v694
  %v696 = vtanh.pop %v682
  %v697 = vtanh.pop %v683
  %v700 = vrot.slane %v632, 7
  %v701 = vrot.slane %v633, 7
  %v704 = vmul.f32 %v693, %v700
  %v705 = vmul.f32 %v695, %v701
  %708 = vrot.lane.b32.xlu0 %v696, 124
  %v709 = vpop.permute.xlu0 %708
  %710 = vrot.lane.b32.xlu0 %v697, 124
  %v711 = vpop.permute.xlu0 %710
  %v714 = vmul.f32 %v693, %v709
  %v715 = vmul.f32 %v695, %v711
  %718 = vrot.lane.b32.xlu0 %v714, 2
  %v719 = vpop.permute.xlu0 %718
  %720 = vrot.lane.b32.xlu0 %v715, 2
  %v721 = vpop.permute.xlu0 %720
  %v724 = vadd.f32 %v704, %v719
  %v725 = vadd.f32 %v705, %v721
  %v726 = vtanh.pop %v724
  %v727 = vtanh.pop %v725
  %730 = vrot.lane.b32.xlu0 %v726, 4
  %v731 = vpop.permute.xlu0 %730
  %732 = vrot.lane.b32.xlu0 %v727, 4
  %v733 = vpop.permute.xlu0 %732
  %v736 = vmul.f32 %v693, %v731
  %v737 = vmul.f32 %v695, %v733
  %739 = vset.pattern.permute.xlu0 6
  %740 = vperm.xlu0 %739, %v736
  %v741 = vpop.permute.xlu0 %740
  %744 = vset.pattern.permute.xlu0 6
  %745 = vperm.xlu0 %744, %v737
  %v746 = vpop.permute.xlu0 %745
  %v748 = vmul.f32 %v741, %v127
  %v749 = vmul.f32 %v746, %v127
  %v752 = vrot.slane %v748, 7
  %v753 = vrot.slane %v749, 7
  %v756 = vadd.f32 %v122, %v752
  %v757 = vadd.f32 %v123, %v753
  %758 = vset.pattern.permute.xlu0 7
  %759 = vperm.xlu0 %758, %v736
  %v760 = vpop.permute.xlu0 %759
  %762 = vset.pattern.permute.xlu0 7
  %763 = vperm.xlu0 %762, %v737
  %v764 = vpop.permute.xlu0 %763
  %v766 = vmul.f32 %v760, %v134
  %v767 = vmul.f32 %v764, %v134
  %v770 = vrot.slane %v766, 7
  %v771 = vrot.slane %v767, 7
  %v774 = vadd.f32 %v756, %v770
  %v775 = vadd.f32 %v757, %v771
  %v776 = vxor.u32 %v774, 2147483648
  %v777 = vxor.u32 %v775, 2147483648
  %v778 = vmul.f32 %v776, 1.442695
  %v779 = vpow.pop %v778
  %v780 = vmul.f32 %v777, 1.442695
  %v781 = vpow.pop %v780
  %v782 = vadd.f32 %v779, 1.0
  %v783 = vadd.f32 %v781, 1.0
  %v784 = vrcp.pop %v782
  %v785 = vmul.f32 1.0, %v784
  %v786 = vrcp.pop %v783
  %v787 = vmul.f32 1.0, %v786
  %v788 = vtanh.pop %v774
  %v789 = vtanh.pop %v775
  %v792 = vrot.slane %v724, 7
  %v793 = vrot.slane %v725, 7
  %v796 = vmul.f32 %v785, %v792
  %v797 = vmul.f32 %v787, %v793
  %800 = vrot.lane.b32.xlu0 %v788, 124
  %v801 = vpop.permute.xlu0 %800
  %802 = vrot.lane.b32.xlu0 %v789, 124
  %v803 = vpop.permute.xlu0 %802
  %v806 = vmul.f32 %v785, %v801
  %v807 = vmul.f32 %v787, %v803
  %810 = vrot.lane.b32.xlu0 %v806, 2
  %v811 = vpop.permute.xlu0 %810
  %812 = vrot.lane.b32.xlu0 %v807, 2
  %v813 = vpop.permute.xlu0 %812
  %v816 = vadd.f32 %v796, %v811
  %v817 = vadd.f32 %v797, %v813
  %v818 = vtanh.pop %v816
  %v819 = vtanh.pop %v817
  %822 = vrot.lane.b32.xlu0 %v818, 4
  %v823 = vpop.permute.xlu0 %822
  %824 = vrot.lane.b32.xlu0 %v819, 4
  %v825 = vpop.permute.xlu0 %824
  %v828 = vmul.f32 %v785, %v823
  %v829 = vmul.f32 %v787, %v825
  %v830 = vmax.f32 %v828, 0.0
  %v831 = vmax.f32 %v829, 0.0
  %v832 = vld [vmem:[%s4] sm:$0x1]
  %834 = vset.pattern.permute.xlu0 6
  %835 = vperm.xlu0 %834, %v830
  %v836 = vpop.permute.xlu0 %835
  %839 = vset.pattern.permute.xlu0 6
  %840 = vperm.xlu0 %839, %v831
  %v841 = vpop.permute.xlu0 %840
  %v843 = vlaneseq
  %v844 = vshrl.u32 %v843, 7
  %v845 = vsub.s32 0, %v844
  %v846 = vrot.slane %v832, %v845
  %v847 = vmul.f32 %v836, %v846
  %v848 = vmul.f32 %v841, %v846
  %v849 = vld [vmem:[%s4 + $0x1] sm:$0x1]
  %850 = vset.pattern.permute.xlu0 7
  %851 = vperm.xlu0 %850, %v830
  %v852 = vpop.permute.xlu0 %851
  %854 = vset.pattern.permute.xlu0 7
  %855 = vperm.xlu0 %854, %v831
  %v856 = vpop.permute.xlu0 %855
  %v858 = vlaneseq
  %v859 = vshrl.u32 %v858, 7
  %v860 = vsub.s32 0, %v859
  %v861 = vrot.slane %v849, %v860
  %v862 = vmul.f32 %v852, %v861
  %v863 = vmul.f32 %v856, %v861
  %v864 = vadd.f32 %v847, %v862
  %v865 = vadd.f32 %v848, %v863
  %v866 = vld [vmem:[%s5] sm:$0x1]
  %v868 = vlaneseq
  %v869 = vshrl.u32 %v868, 7
  %v870 = vsub.s32 0, %v869
  %v871 = vrot.slane %v866, %v870
  %v873 = vadd.f32 %v864, %v871
  %v874 = vadd.f32 %v865, %v871
  %v875 = vmax.f32 %v873, 0.0
  %v876 = vmax.f32 %v874, 0.0
  %v877 = vld [vmem:[%s6] sm:$0x1]
  %v879 = vlaneseq
  %v880 = vshrl.u32 %v879, 7
  %v881 = vsub.s32 0, %v880
  %v882 = vrot.slane %v877, %v881
  %v884 = vmul.f32 %v875, %v882
  %v885 = vmul.f32 %v876, %v882
  %v888 = vrot.slane %v885, 7
  %vm891 = vcmask 1047559
  %v892 = vsel %vm891, %v884, 0.0
  %893 = vadd.xlane.f32.xlu0 %v892
  %v894 = vpop.xlane.xlu0 %893
  %vm895 = vcmask 1040384
  %v896 = vsel %vm895, %v888, 0.0
  %897 = vadd.xlane.f32.xlu0 %v896
  %v898 = vpop.xlane.xlu0 %897
  %v899 = vld [vmem:[#allocation2] sm:$0x1]
  %v901 = vlaneseq
  %v902 = vshrl.u32 %v901, 7
  %v903 = vsub.s32 0, %v902
  %v904 = vrot.slane %v899, %v903
  %v906 = vadd.f32 %v894, %v904
  %v907 = vadd.f32 %v898, %v904
  %vm908 = vcmask 7175
  %909 = vst.msk [vmem:[%s8 - $0x7] sm:$0x80] %vm908, %v906
  %vm910 = vcmask 0
  %911 = vst.msk [vmem:[%s8 + $0x1] sm:$0x1] %vm910, %v907
  // Predicated region
  $region34: #{lstm1_forward.1} parent=0 // pred_check
    _
  $region35: #{lstm1_forward.1} parent=0 // pred_check_branch
    %913 = sbr.rel (0) target = $region37
  $region36: #{lstm1_forward.1} parent=0 // pred_region
    _
  $region37: #{lstm1_forward.1} parent=0 // pred_fallthru
    _
  // Predicated region
  $region38: #{lstm1_forward.1} parent=0 // pred_check
    _
  $region39: #{lstm1_forward.1} parent=0 // pred_check_branch
    %915 = sbr.rel (0) target = $region41
  $region40: #{lstm1_forward.1} parent=0 // pred_region
    _
  $region41: #{lstm1_forward.1} parent=0 // pred_fallthru
    _

</llo_original>
